<compile_context>
chip_gen: v7x
topology: tpu7x:2x2x1
jax: 0.10.0
libtpu: 0.0.40
codegen_flags: <defaults>
</compile_context>

<pallas_src>
import numpy as np
import jax
import jax.numpy as jnp
from jax.experimental import pallas as pl
from jax.experimental.pallas import tpu as pltpu

EMBED_DIM = 32      # matches hidden_dim=32 in the dna_models config
SCALE = 30.0        # GaussianFourierProjection default scale
B = 2               # batch of time steps
TWO_PI = 2.0 * np.pi


# ----------------------------- Pallas kernel -----------------------------
def _gfp_kernel(x_ref, w_ref, o_ref):
    # x_ref: SMEM (B,)      -- time-step scalars
    # w_ref: VMEM (1, half) -- frozen W already scaled by 2*pi at init
    # o_ref: VMEM (B, 2*half)
    half = w_ref.shape[1]
    w2pi = w_ref[...]                                   # load the table once
    for b in range(x_ref.shape[0]):                     # static unroll, B=2 rows
        # scalar splat from SMEM * vreg table (VPU broadcast-mul)
        proj = jnp.full((1, half), x_ref[b], jnp.float32) * w2pi
        # sin/cos = VPU range-reduction + polynomial; two direct slice stores,
        # no lane-concat shuffle.
        o_ref[b:b + 1, :half] = jnp.sin(proj)
        o_ref[b:b + 1, half:] = jnp.cos(proj)


# ----------------------------- parameter init -----------------------------
def init_gfp_weight(key, embed_dim=EMBED_DIM, scale=SCALE):
    """Returns (W, W_2pi): W matches torch.randn(embed_dim//2)*scale; W_2pi is the
    frozen table with 2*pi folded in once and pre-shaped (1, half) for the kernel."""
    w = jax.random.normal(key, (embed_dim // 2,), jnp.float32) * scale
    w2pi = (w * TWO_PI).reshape(1, embed_dim // 2).astype(jnp.float32)
    return w, w2pi


# ----------------------------- wrapper -----------------------------
def gaussian_fourier_projection(x, w2pi):
    """x: [B] f32 time steps, w2pi: [1, embed_dim//2] frozen W*2pi -> [B, embed_dim]."""
    b = x.shape[0]
    half = w2pi.shape[1]
    return pl.pallas_call(
        _gfp_kernel,
        out_shape=jax.ShapeDtypeStruct((b, 2 * half), jnp.float32),
        in_specs=[
            pl.BlockSpec(memory_space=pltpu.MemorySpace.SMEM),   # x: scalars, no vector DMA
            pl.BlockSpec(memory_space=pltpu.MemorySpace.VMEM),   # W*2pi table
        ],
        out_specs=pl.BlockSpec(memory_space=pltpu.MemorySpace.VMEM),
    )(x, w2pi)


# ----------------------------- pure-JAX reference -----------------------------
def _reference(x, w):
    proj = x[:, None] * w[None, :] * TWO_PI              # PyTorch op order: (x*W)*2pi
    return jnp.concatenate([jnp.sin(proj), jnp.cos(proj)], axis=-1)


if __name__ == "__main__":
    key = jax.random.PRNGKey(0)
    kw, kt = jax.random.split(key)

    # nn.Parameter(torch.randn(embed_dim // 2) * scale, requires_grad=False)
    w, w2pi = init_gfp_weight(kw)
    # time steps in [0, 1), as fed by the diffusion / flow-matching model
    t = jax.random.uniform(kt, (B,), jnp.float32)

    out = jax.jit(gaussian_fourier_projection)(t, w2pi)
    out = jax.block_until_ready(out)
    assert out.shape == (B, EMBED_DIM), out.shape

    ref = _reference(t, w)
    # Folding 2*pi into the frozen W perturbs proj by a couple of ulps; since
    # |proj| reaches O(hundreds), sin/cos propagate that absolutely, so scale
    # the tolerance by max|proj| (per the review's correctness note).
    max_proj = float(jnp.max(jnp.abs(t[:, None] * w[None, :] * TWO_PI)))
    atol = max(1e-5, 8.0 * float(np.finfo(np.float32).eps) * max_proj)
    assert jnp.allclose(out, ref, atol=atol, rtol=1e-5), float(jnp.max(jnp.abs(out - ref)))
    print("KERNEL_OK")
</pallas_src>

<mosaic_0001>
module attributes {stable_mosaic.version = 11 : i64} {
  func.func @_gfp_kernel(%arg0: memref<2xf32, #tpu.memory_space<smem>>, %arg1: memref<1x16xf32, #tpu.memory_space<vmem>>, %arg2: memref<2x32xf32, #tpu.memory_space<vmem>>) attributes {dimension_semantics = [], scalar_prefetch = 0 : i64, scratch_operands = 0 : i64, tpu.core_type = #tpu.core_type<tc>} {
    %c0 = arith.constant 0 : index
    %c0_0 = arith.constant 0 : index
    %0 = vector.load %arg1[%c0, %c0_0] : memref<1x16xf32, #tpu.memory_space<vmem>>, vector<1x16xf32>
    %c0_1 = arith.constant 0 : index
    %1 = memref.load %arg0[%c0_1] : memref<2xf32, #tpu.memory_space<smem>>
    %2 = vector.broadcast %1 : f32 to vector<1x16xf32>
    %3 = arith.mulf %2, %0 : vector<1x16xf32>
    %4 = math.sin %3 : vector<1x16xf32>
    %c0_2 = arith.constant 0 : index
    %c0_3 = arith.constant 0 : index
    %5 = vector.load %arg2[%c0_2, %c0_3] : memref<2x32xf32, #tpu.memory_space<vmem>>, vector<1x16xf32>
    tpu.vector_store %arg2[%c0_2, %c0_3], %4 {strides = array<i32>} : memref<2x32xf32, #tpu.memory_space<vmem>>, vector<1x16xf32>,
    %6 = math.cos %3 : vector<1x16xf32>
    %c0_4 = arith.constant 0 : index
    %c16 = arith.constant 16 : index
    %7 = vector.load %arg2[%c0_4, %c16] : memref<2x32xf32, #tpu.memory_space<vmem>>, vector<1x16xf32>
    tpu.vector_store %arg2[%c0_4, %c16], %6 {strides = array<i32>} : memref<2x32xf32, #tpu.memory_space<vmem>>, vector<1x16xf32>,
    %c1 = arith.constant 1 : index
    %8 = memref.load %arg0[%c1] : memref<2xf32, #tpu.memory_space<smem>>
    %9 = vector.broadcast %8 : f32 to vector<1x16xf32>
    %10 = arith.mulf %9, %0 : vector<1x16xf32>
    %11 = math.sin %10 : vector<1x16xf32>
    %c1_5 = arith.constant 1 : index
    %c0_6 = arith.constant 0 : index
    %12 = vector.load %arg2[%c1_5, %c0_6] : memref<2x32xf32, #tpu.memory_space<vmem>>, vector<1x16xf32>
    tpu.vector_store %arg2[%c1_5, %c0_6], %11 {strides = array<i32>} : memref<2x32xf32, #tpu.memory_space<vmem>>, vector<1x16xf32>,
    %13 = math.cos %10 : vector<1x16xf32>
    %c1_7 = arith.constant 1 : index
    %c16_8 = arith.constant 16 : index
    %14 = vector.load %arg2[%c1_7, %c16_8] : memref<2x32xf32, #tpu.memory_space<vmem>>, vector<1x16xf32>
    tpu.vector_store %arg2[%c1_7, %c16_8], %13 {strides = array<i32>} : memref<2x32xf32, #tpu.memory_space<vmem>>, vector<1x16xf32>,
    return
  }
}

</mosaic_0001>

<llo_original>
// kernel: gaussian_fourier_projection.1
$region0: #{gaussian_fourier_projection.1}
  #allocation0 [shape = 'u32[]', space=smem, size = 0x4, offset = 0x4, fixed_abs, tag = 'smem constant byte address 0x4 - core index']
  #allocation1 [shape = 'u32[144,128]{1,0:T(1,128)}', space=vmem, size = 0x12000, scoped, tag = 'internal scratch']
  %s0 = inlined_call_operand.hbm [shape: f32[2], index: 0, kind: input, shape index: {}]
  %s1 = inlined_call_operand.vmem [shape: f32[1,16], index: 1, kind: input, shape index: {}]
  %s2 = inlined_call_operand.hbm [shape: f32[2,32], index: 2, kind: output, shape index: {}]
  %s3 = sld [smem:[#allocation0]]
  $region22: #{gaussian_fourier_projection.1} parent=0
    _
  %s5 = ssub.s32 1, %s3
  %s6 = scalar_select 0, %s5, %s3
  $region1: #{gaussian_fourier_projection.1} parent=0
    #allocation2 [shape = 'u8[512]{0}', space=smem, size = 0x200, scoped, tag = 'input window, operand 0, single buffered']
    #allocation3 [shape = 's32[1]{0}', space=sflag, size = 0x4, scoped, tag = 'scoped memory for gaussian_fourier_projection.1']
    #allocation4 [shape = 's32[1]{0}', space=sflag, size = 0x4, scoped, tag = 'scoped memory for gaussian_fourier_projection.1']
    #allocation5 [shape = 'u8[1024]{0}', space=vmem, size = 0x400, scoped, tag = 'output window, operand 0, single buffered']
    %7 = vsyncpa [#allocation4], 0
    %8 = vsyncpa [#allocation3], 0
    // Predicated region
    $region2: #{gaussian_fourier_projection.1} parent=1 // pred_check
      _
    $region3: #{gaussian_fourier_projection.1} parent=1 // pred_check_branch
      %10 = sbr.rel (0) target = $region5
    $region4: #{gaussian_fourier_projection.1} parent=1 // pred_region
      %s12 = ssub.s32 16, 16
      %13 = vsyncadd [#allocation4], %s12
      %16 = dma.hbm_to_smem %s0, 16, [#allocation2], [#allocation4]
    $region5: #{gaussian_fourier_projection.1} parent=1 // pred_fallthru
      _
    // Predicated region
    $region6: #{gaussian_fourier_projection.1} parent=1 // pred_check
      _
    $region7: #{gaussian_fourier_projection.1} parent=1 // pred_check_branch
      %18 = sbr.rel (0) target = $region9
    $region8: #{gaussian_fourier_projection.1} parent=1 // pred_region
      _
    $region9: #{gaussian_fourier_projection.1} parent=1 // pred_fallthru
      _
    // Predicated region
    $region10: #{gaussian_fourier_projection.1} parent=1 // pred_check
      _
    $region11: #{gaussian_fourier_projection.1} parent=1 // pred_check_branch
      %20 = sbr.rel (0) target = $region13
    $region12: #{gaussian_fourier_projection.1} parent=1 // pred_region
      %21 = dma.done [#allocation4], 16
    $region13: #{gaussian_fourier_projection.1} parent=1 // pred_fallthru
      _
    %22 = sfence
    %v23 = vld [vmem:[%s1] sm:$0x1]
    %s24 = sld [smem:[#allocation2]]
    %v25 = vstv %s24
    %v26 = vmul.f32 %v25, %v23
    %v27 = vand.u32 2147483647, %v26
    %vm28 = vcmp.le.f32.partialorder %v27, 0.7853982
    %vm29 = vcmp.lt.s32.totalorder %v26, 0
    %v30 = vand.u32 %v26, 2139095040
    %v31 = vshrl.u32 %v30, 23
    %v32 = vsub.s32 %v31, 127
    %v33 = vand.u32 2147483647, %v26
    %v34 = vand.u32 %v33, 8388607
    %v35 = vor.u32 %v34, 8388608
    %v36 = vsub.s32 0, %v35
    %v37 = vadd.s32 %v32, 1
    %vm38 = vcmp.gt.s32.totalorder %v37, 0
    %v39 = vsel %vm38, %v37, 0
    %v40 = vshrl.u32 %v39, 5
    %v41 = vand.u32 %v39, 31
    %v42 = vsub.s32 32, %v41
    %v43 = vshrl.u32 683565275, %v42
    %v44 = vshll.u32 683565275, %v41
    %v45 = vshrl.u32 2475754826, %v42
    %v46 = vor.u32 %v44, %v45
    %v47 = vshll.u32 2475754826, %v41
    %v48 = vshrl.u32 2131351028, %v42
    %v49 = vor.u32 %v47, %v48
    %v50 = vshll.u32 2131351028, %v41
    %v51 = vshrl.u32 2102212464, %v42
    %v52 = vor.u32 %v50, %v51
    %v53 = vshll.u32 2102212464, %v41
    %v54 = vshrl.u32 920167782, %v42
    %v55 = vor.u32 %v53, %v54
    %v56 = vshll.u32 920167782, %v41
    %v57 = vshrl.u32 1326507024, %v42
    %v58 = vor.u32 %v56, %v57
    %vm59 = vcmp.lt.s32.totalorder %v40, 1
    %vm60 = vcmp.lt.s32.totalorder %v40, 2
    %vm61 = vcmp.lt.s32.totalorder %v40, 3
    %vm62 = vcmp.lt.s32.totalorder %v40, 4
    %v63 = vsel %vm59, %v43, %v46
    %v64 = vsel %vm62, %v52, 2102212464
    %v65 = vsel %vm61, %v49, %v64
    %v66 = vsel %vm60, %v63, %v65
    %v67 = vsel %vm59, %v46, %v49
    %v68 = vsel %vm62, %v55, 920167782
    %v69 = vsel %vm61, %v52, %v68
    %v70 = vsel %vm60, %v67, %v69
    %v71 = vsel %vm59, %v49, %v52
    %v72 = vsel %vm62, %v58, 1326507024
    %v73 = vsel %vm61, %v55, %v72
    %v74 = vsel %vm60, %v71, %v73
    %v75 = vshll.u32 %v35, 8
    %v76 = vmul.u32.u64.compose %v75, %v74
    %v77 = vextract.low.u32 %v76
    %v78 = vextract.high.u32 %v76
    %v79 = vmul.u32.u64.compose %v75, %v70
    %v80 = vextract.low.u32 %v79
    %v81 = vextract.high.u32 %v79
    %v82 = vmul.u32 %v75, %v66
    %v83 = vadd.s32 %v78, %v80
    %vm84 = vc.u32 %v78, %v80
    %v85 = vadd.s32 %v81, 1
    %v86 = vsel %vm84, %v85, %v81
    %v87 = vadd.s32 %v82, %v86
    %v88 = vadd.s32 %v87, 536870912
    %v89 = vshrl.u32 %v88, 30
    %v90 = vshll.u32 %v89, 30
    %v91 = vsub.s32 %v87, %v90
    %vm92 = vcmp.lt.s32.totalorder %v91, 0
    %v93 = vsub.s32 0, %v91
    %v94 = vsel %vm92, %v93, %v91
    %v95 = vclz %v94
    %v96 = vsub.s32 %v95, 2
    %vm97 = vcmp.gt.s32.totalorder 0, %v96
    %v98 = vsel %vm97, 0, %v96
    %v99 = vsub.s32 32, %v98
    %v100 = vshll.u32 %v91, %v98
    %v101 = vshrl.u32 %v83, %v99
    %v102 = vor.u32 %v100, %v101
    %v103 = vsub.s32 4294967266, %v98
    %v104 = vadd.s32 %v103, 127
    %v105 = vshll.u32 %v104, 23
    %v106 = vor.u32 4788187, %v105
    %v107 = vand.u32 2147483647, %v106
    %v109 = vcvt.s32.f32 %v102
    %v110 = vmul.f32 %v109, %v107
    %v111 = vxor.u32 %v110, 2147483648
    %v112 = vsel %vm29, %v111, %v110
    %v113 = vsub.s32 4, %v89
    %v114 = vsel %vm29, %v113, %v89
    %v115 = vsel %vm28, %v26, %v112
    %v116 = vsel %vm28, 0, %v114
    %v117 = vcosq.f32.pop %v115
    %v118 = vsinq.f32.pop %v115
    %vm119 = vweird.f32 %v26
    %v120 = vadd.s32 %v116, 3
    %v121 = vand.u32 %v120, 3
    %vm122 = vcmp.lt.s32.totalorder %v121, 2
    %vm123 = vcmp.eq.s32.totalorder %v121, 0
    %v124 = vxor.u32 %v118, 2147483648
    %v125 = vsel %vm123, %v117, %v124
    %vm126 = vcmp.eq.s32.totalorder %v121, 2
    %v127 = vxor.u32 %v117, 2147483648
    %v128 = vsel %vm126, %v127, %v118
    %v129 = vsel %vm122, %v125, %v128
    %v130 = vsel %vm119, nan, %v129
    %vm131 = vcmask 122880
    %132 = vst.msk [vmem:[#allocation5] sm:$0x1] %vm131, %v130
    %v133 = vand.u32 2147483647, %v26
    %vm134 = vcmp.le.f32.partialorder %v133, 0.7853982
    %vm135 = vcmp.lt.s32.totalorder %v26, 0
    %v136 = vand.u32 %v26, 2139095040
    %v137 = vshrl.u32 %v136, 23
    %v138 = vsub.s32 %v137, 127
    %v139 = vand.u32 2147483647, %v26
    %v140 = vand.u32 %v139, 8388607
    %v141 = vor.u32 %v140, 8388608
    %v142 = vsub.s32 0, %v141
    %v143 = vadd.s32 %v138, 1
    %vm144 = vcmp.gt.s32.totalorder %v143, 0
    %v145 = vsel %vm144, %v143, 0
    %v146 = vshrl.u32 %v145, 5
    %v147 = vand.u32 %v145, 31
    %v148 = vsub.s32 32, %v147
    %v149 = vshrl.u32 683565275, %v148
    %v150 = vshll.u32 683565275, %v147
    %v151 = vshrl.u32 2475754826, %v148
    %v152 = vor.u32 %v150, %v151
    %v153 = vshll.u32 2475754826, %v147
    %v154 = vshrl.u32 2131351028, %v148
    %v155 = vor.u32 %v153, %v154
    %v156 = vshll.u32 2131351028, %v147
    %v157 = vshrl.u32 2102212464, %v148
    %v158 = vor.u32 %v156, %v157
    %v159 = vshll.u32 2102212464, %v147
    %v160 = vshrl.u32 920167782, %v148
    %v161 = vor.u32 %v159, %v160
    %v162 = vshll.u32 920167782, %v147
    %v163 = vshrl.u32 1326507024, %v148
    %v164 = vor.u32 %v162, %v163
    %vm165 = vcmp.lt.s32.totalorder %v146, 1
    %vm166 = vcmp.lt.s32.totalorder %v146, 2
    %vm167 = vcmp.lt.s32.totalorder %v146, 3
    %vm168 = vcmp.lt.s32.totalorder %v146, 4
    %v169 = vsel %vm165, %v149, %v152
    %v170 = vsel %vm168, %v158, 2102212464
    %v171 = vsel %vm167, %v155, %v170
    %v172 = vsel %vm166, %v169, %v171
    %v173 = vsel %vm165, %v152, %v155
    %v174 = vsel %vm168, %v161, 920167782
    %v175 = vsel %vm167, %v158, %v174
    %v176 = vsel %vm166, %v173, %v175
    %v177 = vsel %vm165, %v155, %v158
    %v178 = vsel %vm168, %v164, 1326507024
    %v179 = vsel %vm167, %v161, %v178
    %v180 = vsel %vm166, %v177, %v179
    %v181 = vshll.u32 %v141, 8
    %v182 = vmul.u32.u64.compose %v181, %v180
    %v183 = vextract.low.u32 %v182
    %v184 = vextract.high.u32 %v182
    %v185 = vmul.u32.u64.compose %v181, %v176
    %v186 = vextract.low.u32 %v185
    %v187 = vextract.high.u32 %v185
    %v188 = vmul.u32 %v181, %v172
    %v189 = vadd.s32 %v184, %v186
    %vm190 = vc.u32 %v184, %v186
    %v191 = vadd.s32 %v187, 1
    %v192 = vsel %vm190, %v191, %v187
    %v193 = vadd.s32 %v188, %v192
    %v194 = vadd.s32 %v193, 536870912
    %v195 = vshrl.u32 %v194, 30
    %v196 = vshll.u32 %v195, 30
    %v197 = vsub.s32 %v193, %v196
    %vm198 = vcmp.lt.s32.totalorder %v197, 0
    %v199 = vsub.s32 0, %v197
    %v200 = vsel %vm198, %v199, %v197
    %v201 = vclz %v200
    %v202 = vsub.s32 %v201, 2
    %vm203 = vcmp.gt.s32.totalorder 0, %v202
    %v204 = vsel %vm203, 0, %v202
    %v205 = vsub.s32 32, %v204
    %v206 = vshll.u32 %v197, %v204
    %v207 = vshrl.u32 %v189, %v205
    %v208 = vor.u32 %v206, %v207
    %v209 = vsub.s32 4294967266, %v204
    %v210 = vadd.s32 %v209, 127
    %v211 = vshll.u32 %v210, 23
    %v212 = vor.u32 4788187, %v211
    %v213 = vand.u32 2147483647, %v212
    %v215 = vcvt.s32.f32 %v208
    %v216 = vmul.f32 %v215, %v213
    %v217 = vxor.u32 %v216, 2147483648
    %v218 = vsel %vm135, %v217, %v216
    %v219 = vsub.s32 4, %v195
    %v220 = vsel %vm135, %v219, %v195
    %v221 = vsel %vm134, %v26, %v218
    %v222 = vsel %vm134, 0, %v220
    %v223 = vcosq.f32.pop %v221
    %v224 = vsinq.f32.pop %v221
    %vm225 = vweird.f32 %v26
    %v226 = vand.u32 %v222, 3
    %vm227 = vcmp.lt.s32.totalorder %v226, 2
    %vm228 = vcmp.eq.s32.totalorder %v226, 0
    %v229 = vxor.u32 %v224, 2147483648
    %v230 = vsel %vm228, %v223, %v229
    %vm231 = vcmp.eq.s32.totalorder %v226, 2
    %v232 = vxor.u32 %v223, 2147483648
    %v233 = vsel %vm231, %v232, %v224
    %v234 = vsel %vm227, %v230, %v233
    %v235 = vsel %vm225, nan, %v234
    %v237 = vlaneseq
    %v238 = vshrl.u32 %v237, 7
    %v239 = vsub.s32 0, %v238
    %v240 = vrot.slane %v235, %v239
    %241 = vrot.lane.b32.xlu0 %v240, 16
    %v242 = vpop.permute.xlu0 %241
    %vm244 = vcmask 254080
    %245 = vst.msk [vmem:[#allocation5] sm:$0x1] %vm244, %v242
    %s246 = sld [smem:[#allocation2 + $0x1]]
    %v247 = vstv %s246
    %v248 = vmul.f32 %v247, %v23
    %v249 = vand.u32 2147483647, %v248
    %vm250 = vcmp.le.f32.partialorder %v249, 0.7853982
    %vm251 = vcmp.lt.s32.totalorder %v248, 0
    %v252 = vand.u32 %v248, 2139095040
    %v253 = vshrl.u32 %v252, 23
    %v254 = vsub.s32 %v253, 127
    %v255 = vand.u32 2147483647, %v248
    %v256 = vand.u32 %v255, 8388607
    %v257 = vor.u32 %v256, 8388608
    %v258 = vsub.s32 0, %v257
    %v259 = vadd.s32 %v254, 1
    %vm260 = vcmp.gt.s32.totalorder %v259, 0
    %v261 = vsel %vm260, %v259, 0
    %v262 = vshrl.u32 %v261, 5
    %v263 = vand.u32 %v261, 31
    %v264 = vsub.s32 32, %v263
    %v265 = vshrl.u32 683565275, %v264
    %v266 = vshll.u32 683565275, %v263
    %v267 = vshrl.u32 2475754826, %v264
    %v268 = vor.u32 %v266, %v267
    %v269 = vshll.u32 2475754826, %v263
    %v270 = vshrl.u32 2131351028, %v264
    %v271 = vor.u32 %v269, %v270
    %v272 = vshll.u32 2131351028, %v263
    %v273 = vshrl.u32 2102212464, %v264
    %v274 = vor.u32 %v272, %v273
    %v275 = vshll.u32 2102212464, %v263
    %v276 = vshrl.u32 920167782, %v264
    %v277 = vor.u32 %v275, %v276
    %v278 = vshll.u32 920167782, %v263
    %v279 = vshrl.u32 1326507024, %v264
    %v280 = vor.u32 %v278, %v279
    %vm281 = vcmp.lt.s32.totalorder %v262, 1
    %vm282 = vcmp.lt.s32.totalorder %v262, 2
    %vm283 = vcmp.lt.s32.totalorder %v262, 3
    %vm284 = vcmp.lt.s32.totalorder %v262, 4
    %v285 = vsel %vm281, %v265, %v268
    %v286 = vsel %vm284, %v274, 2102212464
    %v287 = vsel %vm283, %v271, %v286
    %v288 = vsel %vm282, %v285, %v287
    %v289 = vsel %vm281, %v268, %v271
    %v290 = vsel %vm284, %v277, 920167782
    %v291 = vsel %vm283, %v274, %v290
    %v292 = vsel %vm282, %v289, %v291
    %v293 = vsel %vm281, %v271, %v274
    %v294 = vsel %vm284, %v280, 1326507024
    %v295 = vsel %vm283, %v277, %v294
    %v296 = vsel %vm282, %v293, %v295
    %v297 = vshll.u32 %v257, 8
    %v298 = vmul.u32.u64.compose %v297, %v296
    %v299 = vextract.low.u32 %v298
    %v300 = vextract.high.u32 %v298
    %v301 = vmul.u32.u64.compose %v297, %v292
    %v302 = vextract.low.u32 %v301
    %v303 = vextract.high.u32 %v301
    %v304 = vmul.u32 %v297, %v288
    %v305 = vadd.s32 %v300, %v302
    %vm306 = vc.u32 %v300, %v302
    %v307 = vadd.s32 %v303, 1
    %v308 = vsel %vm306, %v307, %v303
    %v309 = vadd.s32 %v304, %v308
    %v310 = vadd.s32 %v309, 536870912
    %v311 = vshrl.u32 %v310, 30
    %v312 = vshll.u32 %v311, 30
    %v313 = vsub.s32 %v309, %v312
    %vm314 = vcmp.lt.s32.totalorder %v313, 0
    %v315 = vsub.s32 0, %v313
    %v316 = vsel %vm314, %v315, %v313
    %v317 = vclz %v316
    %v318 = vsub.s32 %v317, 2
    %vm319 = vcmp.gt.s32.totalorder 0, %v318
    %v320 = vsel %vm319, 0, %v318
    %v321 = vsub.s32 32, %v320
    %v322 = vshll.u32 %v313, %v320
    %v323 = vshrl.u32 %v305, %v321
    %v324 = vor.u32 %v322, %v323
    %v325 = vsub.s32 4294967266, %v320
    %v326 = vadd.s32 %v325, 127
    %v327 = vshll.u32 %v326, 23
    %v328 = vor.u32 4788187, %v327
    %v329 = vand.u32 2147483647, %v328
    %v331 = vcvt.s32.f32 %v324
    %v332 = vmul.f32 %v331, %v329
    %v333 = vxor.u32 %v332, 2147483648
    %v334 = vsel %vm251, %v333, %v332
    %v335 = vsub.s32 4, %v311
    %v336 = vsel %vm251, %v335, %v311
    %v337 = vsel %vm250, %v248, %v334
    %v338 = vsel %vm250, 0, %v336
    %v339 = vcosq.f32.pop %v337
    %v340 = vsinq.f32.pop %v337
    %vm341 = vweird.f32 %v248
    %v342 = vadd.s32 %v338, 3
    %v343 = vand.u32 %v342, 3
    %vm344 = vcmp.lt.s32.totalorder %v343, 2
    %vm345 = vcmp.eq.s32.totalorder %v343, 0
    %v346 = vxor.u32 %v340, 2147483648
    %v347 = vsel %vm345, %v339, %v346
    %vm348 = vcmp.eq.s32.totalorder %v343, 2
    %v349 = vxor.u32 %v339, 2147483648
    %v350 = vsel %vm348, %v349, %v340
    %v351 = vsel %vm344, %v347, %v350
    %v352 = vsel %vm341, nan, %v351
    %353 = vst.msk [vmem:[#allocation5 + $0x1] sm:$0x1] %vm131, %v352
    %v354 = vand.u32 2147483647, %v248
    %vm355 = vcmp.le.f32.partialorder %v354, 0.7853982
    %vm356 = vcmp.lt.s32.totalorder %v248, 0
    %v357 = vand.u32 %v248, 2139095040
    %v358 = vshrl.u32 %v357, 23
    %v359 = vsub.s32 %v358, 127
    %v360 = vand.u32 2147483647, %v248
    %v361 = vand.u32 %v360, 8388607
    %v362 = vor.u32 %v361, 8388608
    %v363 = vsub.s32 0, %v362
    %v364 = vadd.s32 %v359, 1
    %vm365 = vcmp.gt.s32.totalorder %v364, 0
    %v366 = vsel %vm365, %v364, 0
    %v367 = vshrl.u32 %v366, 5
    %v368 = vand.u32 %v366, 31
    %v369 = vsub.s32 32, %v368
    %v370 = vshrl.u32 683565275, %v369
    %v371 = vshll.u32 683565275, %v368
    %v372 = vshrl.u32 2475754826, %v369
    %v373 = vor.u32 %v371, %v372
    %v374 = vshll.u32 2475754826, %v368
    %v375 = vshrl.u32 2131351028, %v369
    %v376 = vor.u32 %v374, %v375
    %v377 = vshll.u32 2131351028, %v368
    %v378 = vshrl.u32 2102212464, %v369
    %v379 = vor.u32 %v377, %v378
    %v380 = vshll.u32 2102212464, %v368
    %v381 = vshrl.u32 920167782, %v369
    %v382 = vor.u32 %v380, %v381
    %v383 = vshll.u32 920167782, %v368
    %v384 = vshrl.u32 1326507024, %v369
    %v385 = vor.u32 %v383, %v384
    %vm386 = vcmp.lt.s32.totalorder %v367, 1
    %vm387 = vcmp.lt.s32.totalorder %v367, 2
    %vm388 = vcmp.lt.s32.totalorder %v367, 3
    %vm389 = vcmp.lt.s32.totalorder %v367, 4
    %v390 = vsel %vm386, %v370, %v373
    %v391 = vsel %vm389, %v379, 2102212464
    %v392 = vsel %vm388, %v376, %v391
    %v393 = vsel %vm387, %v390, %v392
    %v394 = vsel %vm386, %v373, %v376
    %v395 = vsel %vm389, %v382, 920167782
    %v396 = vsel %vm388, %v379, %v395
    %v397 = vsel %vm387, %v394, %v396
    %v398 = vsel %vm386, %v376, %v379
    %v399 = vsel %vm389, %v385, 1326507024
    %v400 = vsel %vm388, %v382, %v399
    %v401 = vsel %vm387, %v398, %v400
    %v402 = vshll.u32 %v362, 8
    %v403 = vmul.u32.u64.compose %v402, %v401
    %v404 = vextract.low.u32 %v403
    %v405 = vextract.high.u32 %v403
    %v406 = vmul.u32.u64.compose %v402, %v397
    %v407 = vextract.low.u32 %v406
    %v408 = vextract.high.u32 %v406
    %v409 = vmul.u32 %v402, %v393
    %v410 = vadd.s32 %v405, %v407
    %vm411 = vc.u32 %v405, %v407
    %v412 = vadd.s32 %v408, 1
    %v413 = vsel %vm411, %v412, %v408
    %v414 = vadd.s32 %v409, %v413
    %v415 = vadd.s32 %v414, 536870912
    %v416 = vshrl.u32 %v415, 30
    %v417 = vshll.u32 %v416, 30
    %v418 = vsub.s32 %v414, %v417
    %vm419 = vcmp.lt.s32.totalorder %v418, 0
    %v420 = vsub.s32 0, %v418
    %v421 = vsel %vm419, %v420, %v418
    %v422 = vclz %v421
    %v423 = vsub.s32 %v422, 2
    %vm424 = vcmp.gt.s32.totalorder 0, %v423
    %v425 = vsel %vm424, 0, %v423
    %v426 = vsub.s32 32, %v425
    %v427 = vshll.u32 %v418, %v425
    %v428 = vshrl.u32 %v410, %v426
    %v429 = vor.u32 %v427, %v428
    %v430 = vsub.s32 4294967266, %v425
    %v431 = vadd.s32 %v430, 127
    %v432 = vshll.u32 %v431, 23
    %v433 = vor.u32 4788187, %v432
    %v434 = vand.u32 2147483647, %v433
    %v436 = vcvt.s32.f32 %v429
    %v437 = vmul.f32 %v436, %v434
    %v438 = vxor.u32 %v437, 2147483648
    %v439 = vsel %vm356, %v438, %v437
    %v440 = vsub.s32 4, %v416
    %v441 = vsel %vm356, %v440, %v416
    %v442 = vsel %vm355, %v248, %v439
    %v443 = vsel %vm355, 0, %v441
    %v444 = vcosq.f32.pop %v442
    %v445 = vsinq.f32.pop %v442
    %vm446 = vweird.f32 %v248
    %v447 = vand.u32 %v443, 3
    %vm448 = vcmp.lt.s32.totalorder %v447, 2
    %vm449 = vcmp.eq.s32.totalorder %v447, 0
    %v450 = vxor.u32 %v445, 2147483648
    %v451 = vsel %vm449, %v444, %v450
    %vm452 = vcmp.eq.s32.totalorder %v447, 2
    %v453 = vxor.u32 %v444, 2147483648
    %v454 = vsel %vm452, %v453, %v445
    %v455 = vsel %vm448, %v451, %v454
    %v456 = vsel %vm446, nan, %v455
    %v458 = vlaneseq
    %v459 = vshrl.u32 %v458, 7
    %v460 = vsub.s32 0, %v459
    %v461 = vrot.slane %v456, %v460
    %462 = vrot.lane.b32.xlu0 %v461, 16
    %v463 = vpop.permute.xlu0 %462
    %465 = vst.msk [vmem:[#allocation5 + $0x1] sm:$0x1] %vm244, %v463
    // Predicated region
    $region14: #{gaussian_fourier_projection.1} parent=1 // pred_check
      _
    $region15: #{gaussian_fourier_projection.1} parent=1 // pred_check_branch
      %467 = sbr.rel (0) target = $region17
    $region16: #{gaussian_fourier_projection.1} parent=1 // pred_region
      %s469 = ssub.s32 32, 32
      %470 = vsyncadd [#allocation3], %s469
      %s472 = sshll.u32 [#allocation5], 4
      %s473 = int_to_ptr.vmem [resolvable:$true] %s472
      %475 = dma.vmem_to_hbm [thread:$0]  %s473, 32, %s2, [#allocation3]
    $region17: #{gaussian_fourier_projection.1} parent=1 // pred_fallthru
      _
    // Predicated region
    $region18: #{gaussian_fourier_projection.1} parent=1 // pred_check
      _
    $region19: #{gaussian_fourier_projection.1} parent=1 // pred_check_branch
      %477 = sbr.rel (0) target = $region21
    $region20: #{gaussian_fourier_projection.1} parent=1 // pred_region
      %478 = dma.done [#allocation3], 32
    $region21: #{gaussian_fourier_projection.1} parent=1 // pred_fallthru
      _
    %479 = vsyncpa [#allocation3], 1
    %480 = vsyncpa [#allocation4], 1

</llo_original>
